<compile_context>
chip_gen: v5e
topology: v5e:2x2
jax: 0.10.0
libtpu: 0.0.40
codegen_flags: <defaults>
</compile_context>

<pallas_src>
import functools
import re

import jax
import jax.numpy as jnp
from jax.experimental import pallas as pl
from jax.experimental.pallas import tpu as pltpu


def _round_up(a, b):
    return (a + b - 1) // b * b


def _tpu_generation():
    try:
        kind = jax.devices()[0].device_kind
    except Exception:
        return 0
    m = re.search(r"(\d+)", kind)
    return int(m.group(1)) if m else 0


def _quant_matmul_kernel(x_ref, w_ref, scale_ref, bias_ref, offset_ref, o_ref,
                         acc_ref, *, use_int_mxu):
    # x_ref:      (TM, TK)  int8
    # w_ref:      (TK, TN)  int8    (weight pre-transposed once at load time)
    # scale_ref:  (1, TN)   float32
    # bias_ref:   (1, TN)   int32
    # offset_ref: (1, TN)   float32
    # o_ref:      (TM, TN)  int8
    # acc_ref:    (TM, TN)  int32 VMEM scratch, resident across the K grid axis
    k = pl.program_id(2)

    @pl.when(k == 0)
    def _():
        acc_ref[...] = jnp.zeros_like(acc_ref)

    if use_int_mxu:
        # v5e / v6e: native int8 MXU path with int32 accumulation (exact for any K).
        acc_ref[...] += jax.lax.dot_general(
            x_ref[...], w_ref[...], (((1,), (0,)), ((), ())),
            preferred_element_type=jnp.int32)
    else:
        # v7x (no integer MXU): bf16 operands represent int8 exactly; with tk <= 1024
        # every f32 partial stays <= 2^24 so it is an exact integer -> cast to int32
        # and accumulate exactly across K tiles (VALU add has slack in MXU-bound regime).
        part = jax.lax.dot_general(
            x_ref[...].astype(jnp.bfloat16), w_ref[...].astype(jnp.bfloat16),
            (((1,), (0,)), ((), ())), preferred_element_type=jnp.float32)
        acc_ref[...] += part.astype(jnp.int32)

    @pl.when(k == pl.num_programs(2) - 1)
    def _():
        # Strict npu_quant_matmul order: ((acc + bias) * scale) + offset.
        acc = acc_ref[...] + bias_ref[...]
        y = acc.astype(jnp.float32) * scale_ref[...] + offset_ref[...]
        # TODO(synk): npu_quant_matmul may round half away from zero; jnp.round is
        # round-half-to-even.  They differ only on exact .5 results after requant.
        y = jnp.clip(jnp.round(y), -128.0, 127.0)
        o_ref[...] = y.astype(jnp.int8)


@functools.partial(
    jax.jit,
    static_argnames=("tm", "tn", "tk", "use_int_mxu", "w_buffers", "vmem_limit"))
def _linear_a8w8_quant_2d(x2d, w_t, scale2d, bias2d, offset2d, *, tm, tn, tk,
                          use_int_mxu, w_buffers, vmem_limit):
    M, K = x2d.shape
    _, N = w_t.shape
    grid = (M // tm, N // tn, K // tk)

    # Deeper buffering on the dominant per-step DMA stream (the weight) when K is
    # tiled; the extra buffer is one (tk, tn) int8 tile.
    w_spec_kwargs = {} if w_buffers == 2 else dict(pipeline_mode=pl.Buffered(w_buffers))

    kernel = functools.partial(_quant_matmul_kernel, use_int_mxu=use_int_mxu)
    return pl.pallas_call(
        kernel,
        out_shape=jax.ShapeDtypeStruct((M, N), jnp.int8),
        grid_spec=pltpu.PrefetchScalarGridSpec(
            num_scalar_prefetch=0,
            grid=grid,
            in_specs=[
                pl.BlockSpec((tm, tk), lambda i, j, k: (i, k)),          # x
                pl.BlockSpec((tk, tn), lambda i, j, k: (k, j),           # weight (K,N)
                             **w_spec_kwargs),
                pl.BlockSpec((1, tn), lambda i, j, k: (0, j)),           # scale f32
                pl.BlockSpec((1, tn), lambda i, j, k: (0, j)),           # bias  i32
                pl.BlockSpec((1, tn), lambda i, j, k: (0, j)),           # offset f32
            ],
            out_specs=pl.BlockSpec((tm, tn), lambda i, j, k: (i, j)),
            scratch_shapes=[pltpu.VMEM((tm, tn), jnp.int32)],
        ),
        compiler_params=pltpu.CompilerParams(
            dimension_semantics=("parallel", "parallel", "arbitrary"),
            vmem_limit_bytes=vmem_limit,
        ),
    )(x2d, w_t, scale2d, bias2d, offset2d)


def prepare_linear_a8w8_quant(weight, scale, offset=None, bias=None):
    """One-time (model-load) preparation, hoisted out of the per-call path.

    weight: (out_features, in_features) int8
    scale:  (out_features,) float32
    offset: (out_features,) float32 or None
    bias:   (out_features,) int32  or None
    Returns a dict of pre-transposed / pre-padded device arrays + static tiling metadata.
    """
    N, K = weight.shape
    gen = _tpu_generation()
    use_int_mxu = gen in (5, 6)          # v5e/v6e have a native int8/int32 MXU path

    # N tile: 128 matches v5e's 4x128^2 MXU; 256 fills v6e/v7x's 2x256^2.
    tn = 128 if gen <= 5 else 256
    tn = min(tn, _round_up(N, 128))
    N_pad = _round_up(N, tn)

    # K tile: bounds per-step VMEM; on the bf16 path tk <= 1024 keeps every f32
    # partial below 2^24 so the int32 accumulation is exact for any in_features.
    tk_cap = 2048 if use_int_mxu else 1024
    if K <= tk_cap:
        tk, K_pad = K, K
    else:
        tk = tk_cap
        K_pad = _round_up(K, tk)

    # Weight transposed once -> lane-dense (K, N) stream; padded once.
    w_t = weight.astype(jnp.int8).T
    if K_pad != K or N_pad != N:
        w_t = jnp.pad(w_t, ((0, K_pad - K), (0, N_pad - N)))

    scale_f = scale.astype(jnp.float32).reshape(N)
    offset_f = (jnp.zeros((N,), jnp.float32) if offset is None
                else offset.astype(jnp.float32).reshape(N))
    bias_i = (jnp.zeros((N,), jnp.int32) if bias is None
              else bias.astype(jnp.int32).reshape(N))
    if N_pad != N:
        scale_f = jnp.pad(scale_f, (0, N_pad - N))
        offset_f = jnp.pad(offset_f, (0, N_pad - N))
        bias_i = jnp.pad(bias_i, (0, N_pad - N))

    return dict(
        w_t=w_t,
        scale=scale_f.reshape(1, N_pad),
        bias=bias_i.reshape(1, N_pad),
        offset=offset_f.reshape(1, N_pad),
        N=N, K=K, N_pad=N_pad, K_pad=K_pad, tn=tn, tk=tk,
        gen=gen, use_int_mxu=use_int_mxu,
    )


def linear_a8w8_quant(x, params):
    """out_int8 = saturate_int8(round((x_int8 @ W_int8^T + bias) * scale + offset))

    x: (..., in_features) int8; params from prepare_linear_a8w8_quant.
    Returns (..., out_features) int8.
    """
    *lead, K = x.shape
    assert K == params["K"], "in_features mismatch"
    gen = params["gen"]
    N, N_pad, K_pad = params["N"], params["N_pad"], params["K_pad"]
    tn, tk = params["tn"], params["tk"]

    M = 1
    for d in lead:
        M *= d
    x2d = x.reshape(M, K).astype(jnp.int8)

    # M tile: keep the whole activation resident when it fits (weight streamed once);
    # otherwise large tiles (512 / 1024) amortise the weight HBM stream so v6e/v7x stay
    # on the compute roofline for prefill/training shapes.
    tm_cap = 1024 if gen >= 6 else 512
    M_pad = _round_up(M, 32)
    if M_pad <= tm_cap:
        tm = M_pad
    else:
        tm = tm_cap
        M_pad = _round_up(M, tm)

    # v7x has 2 TensorCores sharded over "parallel" grid axes: avoid a (1,1) grid for
    # small (decode-like) problems by splitting the N axis when possible.
    if gen >= 7 and M_pad // tm == 1 and N_pad // tn == 1 and N_pad // 128 >= 2:
        tn = 128

    if M_pad != M or K_pad != K:
        x2d = jnp.pad(x2d, ((0, M_pad - M), (0, K_pad - K)))

    grid_k = K_pad // tk
    w_buffers = 3 if (params["use_int_mxu"] and grid_k >= 2) else 2
    # 48 MiB fits v7x's 64 MiB physical VMEM with headroom; v5e/v6e have 128 MiB.
    vmem_limit = (96 << 20) if gen in (5, 6) else (48 << 20)

    out = _linear_a8w8_quant_2d(
        x2d, params["w_t"], params["scale"], params["bias"], params["offset"],
        tm=tm, tn=tn, tk=tk, use_int_mxu=params["use_int_mxu"],
        w_buffers=w_buffers, vmem_limit=vmem_limit)
    out = out[:M, :N]
    return out.reshape(*lead, N)


if __name__ == "__main__":
    # Module config consistent with LinearA8W8Quant(in, out) defaults (bias=True, offset=False)
    in_features = 32
    out_features = 256
    batch, seq = 2, 8

    key = jax.random.PRNGKey(0)
    kx, kw, ks, kb = jax.random.split(key, 4)

    x = jax.random.randint(kx, (batch, seq, in_features), -128, 128,
                           dtype=jnp.int32).astype(jnp.int8)
    weight = jax.random.randint(kw, (out_features, in_features), -128, 128,
                                dtype=jnp.int32).astype(jnp.int8)
    scale = jax.random.uniform(ks, (out_features,), jnp.float32, 0.001, 0.01)
    bias = jax.random.randint(kb, (out_features,), -100, 100, dtype=jnp.int32)
    offset = None  # offset=False in the module default

    # One-time (model-load) weight preparation, then the per-call kernel.
    params = prepare_linear_a8w8_quant(weight, scale, offset, bias)
    out = linear_a8w8_quant(x, params)
    out = jax.block_until_ready(out)

    # Pure-JAX reference, strict npu order: ((x @ W^T + bias) * scale) + offset.
    acc = jnp.einsum("bsk,nk->bsn", x.astype(jnp.int32), weight.astype(jnp.int32))
    ref = jnp.clip(jnp.round((acc + bias).astype(jnp.float32) * scale),
                   -128.0, 127.0).astype(jnp.int8)

    assert out.shape == (batch, seq, out_features)
    assert out.dtype == jnp.int8
    assert bool(jnp.all(out == ref))

    print("KERNEL_OK")
</pallas_src>

<mosaic_0001>
module attributes {stable_mosaic.version = 11 : i64} {
  func.func @_quant_matmul_kernel(%arg0: i32, %arg1: i32, %arg2: i32, %arg3: memref<32x32xi8, #tpu.memory_space<vmem>>, %arg4: memref<32x128xi8, #tpu.memory_space<vmem>>, %arg5: memref<1x128xf32, #tpu.memory_space<vmem>>, %arg6: memref<1x128xi32, #tpu.memory_space<vmem>>, %arg7: memref<1x128xf32, #tpu.memory_space<vmem>>, %arg8: memref<32x128xi8, #tpu.memory_space<vmem>>, %arg9: memref<32x128xi32, #tpu.memory_space<vmem>>) attributes {dimension_semantics = [#tpu.dimension_semantics<parallel>, #tpu.dimension_semantics<parallel>, #tpu.dimension_semantics<arbitrary>], iteration_bounds = array<i64: 1, 2, 1>, scalar_prefetch = 0 : i64, scratch_operands = 1 : i64, tpu.core_type = #tpu.core_type<tc>, window_params = [{transform_indices = @transform_0, window_bounds = array<i64: 32, 32>}, {transform_indices = @transform_1, window_bounds = array<i64: 32, 128>}, {transform_indices = @transform_2, window_bounds = array<i64: 1, 128>}, {transform_indices = @transform_3, window_bounds = array<i64: 1, 128>}, {transform_indices = @transform_4, window_bounds = array<i64: 1, 128>}, {transform_indices = @transform_5, window_bounds = array<i64: 32, 128>}]} {
    %c0_i32 = arith.constant 0 : i32
    %0 = arith.cmpi eq, %arg2, %c0_i32 : i32
    %1 = arith.extui %0 : i1 to i32
    %c0_i32_0 = arith.constant 0 : i32
    %2 = arith.cmpi ne, %1, %c0_i32_0 : i32
    scf.if %2 {
      %c0_i32_10 = arith.constant 0 : i32
      %15 = vector.broadcast %c0_i32_10 : i32 to vector<32x128xi32>
      %c0_11 = arith.constant 0 : index
      %c0_12 = arith.constant 0 : index
      %16 = vector.load %arg9[%c0_11, %c0_12] : memref<32x128xi32, #tpu.memory_space<vmem>>, vector<32x128xi32>
      tpu.vector_store %arg9[%c0_11, %c0_12], %15 {strides = array<i32>} : memref<32x128xi32, #tpu.memory_space<vmem>>, vector<32x128xi32>,
    } else {
    }
    %c0 = arith.constant 0 : index
    %c0_1 = arith.constant 0 : index
    %3 = vector.load %arg3[%c0, %c0_1] : memref<32x32xi8, #tpu.memory_space<vmem>>, vector<32x32xi8>
    %4 = arith.sitofp %3 : vector<32x32xi8> to vector<32x32xbf16>
    %c0_2 = arith.constant 0 : index
    %c0_3 = arith.constant 0 : index
    %5 = vector.load %arg4[%c0_2, %c0_3] : memref<32x128xi8, #tpu.memory_space<vmem>>, vector<32x128xi8>
    %6 = arith.sitofp %5 : vector<32x128xi8> to vector<32x128xbf16>
    %cst = arith.constant dense<0.000000e+00> : vector<32x128xf32>
    %7 = tpu.matmul %4, %6, %cst {dimension_numbers = #tpu.dot_dimension_numbers<[1], [0], [0], [1], [0, 0, 1, 1], [], []>} : vector<32x32xbf16>, vector<32x128xbf16>, vector<32x128xf32> -> vector<32x128xf32>
    %c0_4 = arith.constant 0 : index
    %c0_5 = arith.constant 0 : index
    %8 = vector.load %arg9[%c0_4, %c0_5] : memref<32x128xi32, #tpu.memory_space<vmem>>, vector<32x128xi32>
    %9 = arith.fptosi %7 : vector<32x128xf32> to vector<32x128xi32>
    %10 = arith.addi %8, %9 : vector<32x128xi32>
    %c0_6 = arith.constant 0 : index
    %c0_7 = arith.constant 0 : index
    %11 = vector.load %arg9[%c0_6, %c0_7] : memref<32x128xi32, #tpu.memory_space<vmem>>, vector<32x128xi32>
    tpu.vector_store %arg9[%c0_6, %c0_7], %10 {strides = array<i32>} : memref<32x128xi32, #tpu.memory_space<vmem>>, vector<32x128xi32>,
    %c0_i32_8 = arith.constant 0 : i32
    %12 = arith.cmpi eq, %arg2, %c0_i32_8 : i32
    %13 = arith.extui %12 : i1 to i32
    %c0_i32_9 = arith.constant 0 : i32
    %14 = arith.cmpi ne, %13, %c0_i32_9 : i32
    scf.if %14 {
      %c0_10 = arith.constant 0 : index
      %c0_11 = arith.constant 0 : index
      %15 = vector.load %arg9[%c0_10, %c0_11] : memref<32x128xi32, #tpu.memory_space<vmem>>, vector<32x128xi32>
      %c0_12 = arith.constant 0 : index
      %c0_13 = arith.constant 0 : index
      %16 = vector.load %arg6[%c0_12, %c0_13] : memref<1x128xi32, #tpu.memory_space<vmem>>, vector<1x128xi32>
      %17 = vector.broadcast %16 : vector<1x128xi32> to vector<32x128xi32>
      %18 = arith.addi %15, %17 : vector<32x128xi32>
      %19 = arith.sitofp %18 : vector<32x128xi32> to vector<32x128xf32>
      %c0_14 = arith.constant 0 : index
      %c0_15 = arith.constant 0 : index
      %20 = vector.load %arg5[%c0_14, %c0_15] : memref<1x128xf32, #tpu.memory_space<vmem>>, vector<1x128xf32>
      %21 = vector.broadcast %20 : vector<1x128xf32> to vector<32x128xf32>
      %22 = arith.mulf %19, %21 : vector<32x128xf32>
      %c0_16 = arith.constant 0 : index
      %c0_17 = arith.constant 0 : index
      %23 = vector.load %arg7[%c0_16, %c0_17] : memref<1x128xf32, #tpu.memory_space<vmem>>, vector<1x128xf32>
      %24 = vector.broadcast %23 : vector<1x128xf32> to vector<32x128xf32>
      %25 = arith.addf %22, %24 : vector<32x128xf32>
      %26 = math.roundeven %25 : vector<32x128xf32>
      %cst_18 = arith.constant -1.280000e+02 : f32
      %cst_19 = arith.constant 1.270000e+02 : f32
      %27 = vector.broadcast %cst_18 : f32 to vector<32x128xf32>
      %28 = arith.maximumf %27, %26 : vector<32x128xf32>
      %29 = vector.broadcast %cst_19 : f32 to vector<32x128xf32>
      %30 = arith.minimumf %29, %28 : vector<32x128xf32>
      %31 = arith.fptosi %30 : vector<32x128xf32> to vector<32x128xi8>
      %c0_20 = arith.constant 0 : index
      %c0_21 = arith.constant 0 : index
      %32 = vector.load %arg8[%c0_20, %c0_21] : memref<32x128xi8, #tpu.memory_space<vmem>>, vector<32x128xi8>
      tpu.vector_store %arg8[%c0_20, %c0_21], %31 {strides = array<i32>} : memref<32x128xi8, #tpu.memory_space<vmem>>, vector<32x128xi8>,
    } else {
    }
    return
  }
  func.func @transform_0(%arg0: i32, %arg1: i32, %arg2: i32) -> (i32, i32) {
    %c0_i32 = arith.constant 0 : i32
    return %arg0, %arg2 : i32, i32
  }
  func.func @transform_1(%arg0: i32, %arg1: i32, %arg2: i32) -> (i32, i32) {
    %c0_i32 = arith.constant 0 : i32
    return %arg2, %arg1 : i32, i32
  }
  func.func @transform_2(%arg0: i32, %arg1: i32, %arg2: i32) -> (i32, i32) {
    %c0_i32 = arith.constant 0 : i32
    %c0_i32_0 = arith.constant 0 : i32
    return %c0_i32, %arg1 : i32, i32
  }
  func.func @transform_3(%arg0: i32, %arg1: i32, %arg2: i32) -> (i32, i32) {
    %c0_i32 = arith.constant 0 : i32
    %c0_i32_0 = arith.constant 0 : i32
    return %c0_i32, %arg1 : i32, i32
  }
  func.func @transform_4(%arg0: i32, %arg1: i32, %arg2: i32) -> (i32, i32) {
    %c0_i32 = arith.constant 0 : i32
    %c0_i32_0 = arith.constant 0 : i32
    return %c0_i32, %arg1 : i32, i32
  }
  func.func @transform_5(%arg0: i32, %arg1: i32, %arg2: i32) -> (i32, i32) {
    %c0_i32 = arith.constant 0 : i32
    return %arg0, %arg1 : i32, i32
  }
}

</mosaic_0001>

<llo_original>
// kernel: _linear_a8w8_quant_2d.1
$region0: #{_linear_a8w8_quant_2d.1}
  #allocation0 [shape = 'u32[]', space=smem, size = 0x4, offset = 0x4, fixed_abs, tag = 'smem constant byte address 0x4 - core index']
  #allocation1 [shape = 'u32[72,128]{1,0:T(1,128)}', space=vmem, size = 0x9000, scoped, tag = 'internal scratch']
  #allocation2 [shape = 's32[32,128]{1,0:T(8,128)}', space=vmem, size = 0x4000, scoped, tag = 'scratch operand']
  %s0 = inlined_call_operand.hbm [shape: s8[32,32], index: 0, kind: input, shape index: {}]
  %s1 = inlined_call_operand.hbm [shape: s8[32,256], index: 1, kind: input, shape index: {}]
  %s2 = inlined_call_operand.hbm [shape: f32[1,256], index: 2, kind: input, shape index: {}]
  %s3 = inlined_call_operand.vmem [shape: s32[1,256], index: 3, kind: input, shape index: {}]
  %s4 = inlined_call_operand.hbm [shape: f32[1,256], index: 4, kind: input, shape index: {}]
  %s5 = inlined_call_operand.hbm [shape: s8[32,256], index: 5, kind: output, shape index: {}]
  %s6 = sld [smem:[#allocation0]]
  $region77: #{_linear_a8w8_quant_2d.1} parent=0
    _
  %s8 = ssub.s32 1, %s6
  %s9 = scalar_select 0, %s8, %s6
  $region1: #{_linear_a8w8_quant_2d.1} parent=0
    #allocation3 [shape = 'u8[4096]{0}', space=vmem, size = 0x1000, scoped, tag = 'input window, operand 0, single buffered']
    #allocation4 [shape = 's32[2]{0}', space=sflag, size = 0x8, scoped, tag = 'scoped memory for _linear_a8w8_quant_2d.1']
    #allocation5 [shape = 's32[2]{0}', space=sflag, size = 0x8, scoped, tag = 'scoped memory for _linear_a8w8_quant_2d.1']
    #allocation6 [shape = 'u8[8192]{0}', space=vmem, size = 0x2000, scoped, tag = 'input window, operand 1']
    #allocation7 [shape = 's32[2]{0}', space=sflag, size = 0x8, scoped, tag = 'scoped memory for _linear_a8w8_quant_2d.1']
    #allocation8 [shape = 'u8[1024]{0}', space=vmem, size = 0x400, scoped, tag = 'input window, operand 2']
    #allocation9 [shape = 'u8[1024]{0}', space=vmem, size = 0x400, scoped, tag = 'input window, operand 4']
    #allocation10 [shape = 's32[2]{0}', space=sflag, size = 0x8, scoped, tag = 'scoped memory for _linear_a8w8_quant_2d.1']
    #allocation11 [shape = 'u8[8192]{0}', space=vmem, size = 0x2000, scoped, tag = 'output window, operand 0']
    %10 = vsyncpa [#allocation4], 0
    %11 = vsyncpa [#allocation7], 0
    %s12 = scalar_lea.sflag [#allocation7], 1
    %13 = vsyncpa %s12, 0
    %14 = vsyncpa [#allocation10], 0
    %s15 = scalar_lea.sflag [#allocation10], 1
    %16 = vsyncpa %s15, 0
    %17 = vsyncpa [#allocation5], 0
    %s18 = scalar_lea.sflag [#allocation5], 1
    %19 = vsyncpa %s18, 0
    loop: start=0, step=1, limit=4
    $region2: #{_linear_a8w8_quant_2d.1} parent=1 // loop_pre_header
      _
    $region3: #{_linear_a8w8_quant_2d.1} parent=1 // loop_header
      %s21 = sphi 0, %s25
      %p22 = scmp.ge.s32.totalorder %s21, 4
      %s28 = sphi 0, %s47
      %s29 = sphi 0, %s43
      %s30 = sphi 0, %s39
      %s31 = sphi 0, %s28
      %s32 = sphi 0, %s29
      %s33 = sphi 0, %s30
      %s34 = sphi 0, %s31
      %s35 = sphi 0, %s32
      %s36 = sphi 0, %s33
      %s52 = sphi 0, %s54
      %s55 = sphi 0, %s52
      %s56 = sphi 0, %s55
      %s72 = sphi 0, %s56
      %s80 = sphi 0, %s82
      %s83 = sphi 0, %s80
      %s84 = sphi 0, %s83
      %s100 = sphi 0, %s84
      %s106 = sphi 0, %s108
      %s109 = sphi 0, %s106
      %s110 = sphi 0, %s109
      %s126 = sphi 0, %s110
      %s132 = sphi 0, %s134
      %s135 = sphi 0, %s132
      %s136 = sphi 0, %s135
      %s152 = sphi 0, %s136
      %s158 = sphi 0, %s160
      %s161 = sphi 0, %s158
      %s162 = sphi 0, %s161
      %s178 = sphi 0, %s162
      %s186 = sphi 0, %s188
      %s189 = sphi 0, %s186
      %s190 = sphi 0, %s189
      %s206 = sphi 0, %s190
    $region4: #{_linear_a8w8_quant_2d.1} parent=1 // loop_header_branch
      %24 = sbr.rel (%p22) target = $region8
    $region5: #{_linear_a8w8_quant_2d.1} parent=1 // loop_body
      %s26 = ssub.s32 %s21, 1
      %s27 = ssub.s32 %s21, 2
      %s37 = sadd.s32 1, %s30
      %p38 = scmp.ge.s32.totalorder %s37, 1
      %s39 = scalar_select %p38, 0, %s37
      %s40 = sadd.s32 1, %s29
      %s41 = scalar_select %p38, %s40, %s29
      %p42 = scmp.ge.s32.totalorder %s41, 2
      %s43 = scalar_select %p42, 0, %s41
      %s44 = sadd.s32 1, %s28
      %s45 = scalar_select %p42, %s44, %s28
      %p46 = scmp.ge.s32.totalorder %s45, 1
      %s47 = scalar_select %p46, 0, %s45
      %s48 = ssub.s32 %s28, %s47
      %s49 = ssub.s32 %s30, %s39
      %s50 = sor.u32 %s48, %s49
      %p51 = scmp.eq.s32.totalorder %s50, 0
      %s53 = sadd.s32 %s52, 1
      %s54 = scalar_select %p51, %s52, %s53
      %p57 = pneg %p51
      %p58 = scmp.eq.s32.totalorder %s21, 1
      %p59 = por %p57, %p58
      %p60 = scmp.ne.s32.totalorder %s52, %s55
      %p61 = scmp.eq.s32.totalorder %s21, 0
      %p62 = por %p60, %p61
      %p63 = scmp.ne.s32.totalorder %s52, %s55
      %p64 = scmp.eq.s32.totalorder %s26, 1
      %p65 = por %p63, %p64
      %p66 = scmp.ne.s32.totalorder %s55, %s56
      %p67 = scmp.eq.s32.totalorder %s26, 0
      %p68 = por %p66, %p67
      %p69 = scmp.ne.s32.totalorder %s55, %s56
      %p70 = scmp.eq.s32.totalorder %s27, 1
      %p71 = por %p69, %p70
      %p73 = scmp.ne.s32.totalorder %s56, %s72
      %p74 = scmp.eq.s32.totalorder %s27, 0
      %p75 = por %p73, %p74
      %s76 = ssub.s32 %s30, %s39
      %s77 = ssub.s32 %s29, %s43
      %s78 = sor.u32 %s76, %s77
      %p79 = scmp.eq.s32.totalorder %s78, 0
      %s81 = sadd.s32 %s80, 1
      %s82 = scalar_select %p79, %s80, %s81
      %p85 = pneg %p79
      %p86 = scmp.eq.s32.totalorder %s21, 1
      %p87 = por %p85, %p86
      %p88 = scmp.ne.s32.totalorder %s80, %s83
      %p89 = scmp.eq.s32.totalorder %s21, 0
      %p90 = por %p88, %p89
      %p91 = scmp.ne.s32.totalorder %s80, %s83
      %p92 = scmp.eq.s32.totalorder %s26, 1
      %p93 = por %p91, %p92
      %p94 = scmp.ne.s32.totalorder %s83, %s84
      %p95 = scmp.eq.s32.totalorder %s26, 0
      %p96 = por %p94, %p95
      %p97 = scmp.ne.s32.totalorder %s83, %s84
      %p98 = scmp.eq.s32.totalorder %s27, 1
      %p99 = por %p97, %p98
      %p101 = scmp.ne.s32.totalorder %s84, %s100
      %p102 = scmp.eq.s32.totalorder %s27, 0
      %p103 = por %p101, %p102
      %s104 = ssub.s32 %s29, %s43
      %p105 = scmp.eq.s32.totalorder %s104, 0
      %s107 = sadd.s32 %s106, 1
      %s108 = scalar_select %p105, %s106, %s107
      %p111 = pneg %p105
      %p112 = scmp.eq.s32.totalorder %s21, 1
      %p113 = por %p111, %p112
      %p114 = scmp.ne.s32.totalorder %s106, %s109
      %p115 = scmp.eq.s32.totalorder %s21, 0
      %p116 = por %p114, %p115
      %p117 = scmp.ne.s32.totalorder %s106, %s109
      %p118 = scmp.eq.s32.totalorder %s26, 1
      %p119 = por %p117, %p118
      %p120 = scmp.ne.s32.totalorder %s109, %s110
      %p121 = scmp.eq.s32.totalorder %s26, 0
      %p122 = por %p120, %p121
      %p123 = scmp.ne.s32.totalorder %s109, %s110
      %p124 = scmp.eq.s32.totalorder %s27, 1
      %p125 = por %p123, %p124
      %p127 = scmp.ne.s32.totalorder %s110, %s126
      %p128 = scmp.eq.s32.totalorder %s27, 0
      %p129 = por %p127, %p128
      %s130 = ssub.s32 %s29, %s43
      %p131 = scmp.eq.s32.totalorder %s130, 0
      %s133 = sadd.s32 %s132, 1
      %s134 = scalar_select %p131, %s132, %s133
      %p137 = pneg %p131
      %p138 = scmp.eq.s32.totalorder %s21, 1
      %p139 = por %p137, %p138
      %p140 = scmp.ne.s32.totalorder %s132, %s135
      %p141 = scmp.eq.s32.totalorder %s21, 0
      %p142 = por %p140, %p141
      %p143 = scmp.ne.s32.totalorder %s132, %s135
      %p144 = scmp.eq.s32.totalorder %s26, 1
      %p145 = por %p143, %p144
      %p146 = scmp.ne.s32.totalorder %s135, %s136
      %p147 = scmp.eq.s32.totalorder %s26, 0
      %p148 = por %p146, %p147
      %p149 = scmp.ne.s32.totalorder %s135, %s136
      %p150 = scmp.eq.s32.totalorder %s27, 1
      %p151 = por %p149, %p150
      %p153 = scmp.ne.s32.totalorder %s136, %s152
      %p154 = scmp.eq.s32.totalorder %s27, 0
      %p155 = por %p153, %p154
      %s156 = ssub.s32 %s29, %s43
      %p157 = scmp.eq.s32.totalorder %s156, 0
      %s159 = sadd.s32 %s158, 1
      %s160 = scalar_select %p157, %s158, %s159
      %p163 = pneg %p157
      %p164 = scmp.eq.s32.totalorder %s21, 1
      %p165 = por %p163, %p164
      %p166 = scmp.ne.s32.totalorder %s158, %s161
      %p167 = scmp.eq.s32.totalorder %s21, 0
      %p168 = por %p166, %p167
      %p169 = scmp.ne.s32.totalorder %s158, %s161
      %p170 = scmp.eq.s32.totalorder %s26, 1
      %p171 = por %p169, %p170
      %p172 = scmp.ne.s32.totalorder %s161, %s162
      %p173 = scmp.eq.s32.totalorder %s26, 0
      %p174 = por %p172, %p173
      %p175 = scmp.ne.s32.totalorder %s161, %s162
      %p176 = scmp.eq.s32.totalorder %s27, 1
      %p177 = por %p175, %p176
      %p179 = scmp.ne.s32.totalorder %s162, %s178
      %p180 = scmp.eq.s32.totalorder %s27, 0
      %p181 = por %p179, %p180
      %s182 = ssub.s32 %s28, %s47
      %s183 = ssub.s32 %s29, %s43
      %s184 = sor.u32 %s182, %s183
      %p185 = scmp.eq.s32.totalorder %s184, 0
      %s187 = sadd.s32 %s186, 1
      %s188 = scalar_select %p185, %s186, %s187
      %p191 = pneg %p185
      %p192 = scmp.eq.s32.totalorder %s21, 1
      %p193 = por %p191, %p192
      %p194 = scmp.ne.s32.totalorder %s186, %s189
      %p195 = scmp.eq.s32.totalorder %s21, 0
      %p196 = por %p194, %p195
      %p197 = scmp.ne.s32.totalorder %s186, %s189
      %p198 = scmp.eq.s32.totalorder %s26, 1
      %p199 = por %p197, %p198
      %p200 = scmp.ne.s32.totalorder %s189, %s190
      %p201 = scmp.eq.s32.totalorder %s26, 0
      %p202 = por %p200, %p201
      %p203 = scmp.ne.s32.totalorder %s189, %s190
      %p204 = scmp.eq.s32.totalorder %s27, 1
      %p205 = por %p203, %p204
      %p207 = scmp.ne.s32.totalorder %s190, %s206
      %p208 = scmp.eq.s32.totalorder %s27, 0
      %p209 = por %p207, %p208
      %p210 = scmp.le.s32.totalorder 1, %s21
      %p211 = scmp.lt.s32.totalorder %s21, 3
      %p212 = pnand %p210, %p211
      %p213 = pneg %p212
      // Predicated region
      $region9: #{_linear_a8w8_quant_2d.1} parent=5 // pred_check
        _
      $region10: #{_linear_a8w8_quant_2d.1} parent=5 // pred_check_branch
        %215 = sbr.rel (%p212) target = $region12
      $region11: #{_linear_a8w8_quant_2d.1} parent=5 // pred_region
        %s216 = ssub.s32 %s21, 1
        // Predicated region
        $region13: #{_linear_a8w8_quant_2d.1} parent=11 // pred_check
          %p217 = pneg %p68
        $region14: #{_linear_a8w8_quant_2d.1} parent=11 // pred_check_branch
          %219 = sbr.rel (%p217) target = $region16
        $region15: #{_linear_a8w8_quant_2d.1} parent=11 // pred_region
          %221 = vsyncadd [#allocation4], 0
          %s222 = sadd.s32 %s33, %s31
          %s223 = smul.addr %s222, 8
          %s224 = scalar_lea.hbm %s0, %s223
          %s226 = sshll.u32 %s224, 4
          %s227 = int_to_ptr.hbm [resolvable:$true] %s226
          %s228 = sshll.u32 [#allocation3], 4
          %s229 = int_to_ptr.vmem [resolvable:$true] %s228
          %231 = dma.hbm_to_vmem [thread:$0]  %s227, 128, %s229, [#allocation4]
        $region16: #{_linear_a8w8_quant_2d.1} parent=11 // pred_fallthru
          _
      $region12: #{_linear_a8w8_quant_2d.1} parent=5 // pred_fallthru
        _
      %p232 = scmp.lt.s32.totalorder %s21, 2
      // Predicated region
      $region17: #{_linear_a8w8_quant_2d.1} parent=5 // pred_check
        %p233 = pneg %p232
      $region18: #{_linear_a8w8_quant_2d.1} parent=5 // pred_check_branch
        %235 = sbr.rel (%p233) target = $region20
      $region19: #{_linear_a8w8_quant_2d.1} parent=5 // pred_region
        // Predicated region
        $region21: #{_linear_a8w8_quant_2d.1} parent=19 // pred_check
          %p236 = pneg %p90
        $region22: #{_linear_a8w8_quant_2d.1} parent=19 // pred_check_branch
          %238 = sbr.rel (%p236) target = $region24
        $region23: #{_linear_a8w8_quant_2d.1} parent=19 // pred_region
          %s239 = sand.u32 %s21, 1
          %s240 = scalar_lea.sflag [#allocation7], %s239
          %s241 = sand.u32 %s80, 1
          %s242 = smul.addr %s241, 8
          %s243 = scalar_lea.vmem [#allocation6], %s242
          %245 = vsyncadd %s240, 0
          %s246 = smul.addr %s30, 2
          %s247 = sadd.s32 %s29, %s246
          %s248 = smul.addr %s247, 8
          %s249 = scalar_lea.hbm %s1, %s248
          %s251 = sshll.u32 %s249, 4
          %s252 = int_to_ptr.hbm [resolvable:$true] %s251
          %s253 = sshll.u32 %s243, 4
          %s254 = int_to_ptr.vmem [resolvable:$true] %s253
          %256 = dma.hbm_to_vmem [thread:$0]  %s252, 128, %s254, %s240
        $region24: #{_linear_a8w8_quant_2d.1} parent=19 // pred_fallthru
          _
        // Predicated region
        $region25: #{_linear_a8w8_quant_2d.1} parent=19 // pred_check
          %p257 = pneg %p116
        $region26: #{_linear_a8w8_quant_2d.1} parent=19 // pred_check_branch
          %259 = sbr.rel (%p257) target = $region28
        $region27: #{_linear_a8w8_quant_2d.1} parent=19 // pred_region
          %s260 = sand.u32 %s21, 1
          %s261 = scalar_lea.sflag [#allocation7], %s260
          %s262 = sand.u32 %s106, 1
          %s263 = scalar_lea.vmem [#allocation8], %s262
          %265 = vsyncadd %s261, 0
          %s266 = scalar_lea.hbm %s2, %s29
          %s268 = sshll.u32 %s266, 4
          %s269 = int_to_ptr.hbm [resolvable:$true] %s268
          %s270 = sshll.u32 %s263, 4
          %s271 = int_to_ptr.vmem [resolvable:$true] %s270
          %273 = dma.hbm_to_vmem [thread:$0]  %s269, 16, %s271, %s261
        $region28: #{_linear_a8w8_quant_2d.1} parent=19 // pred_fallthru
          _
        // Predicated region
        $region29: #{_linear_a8w8_quant_2d.1} parent=19 // pred_check
          %p274 = pneg %p142
        $region30: #{_linear_a8w8_quant_2d.1} parent=19 // pred_check_branch
          %276 = sbr.rel (%p274) target = $region32
        $region31: #{_linear_a8w8_quant_2d.1} parent=19 // pred_region
          %p277 = scmp.lt.s32.totalorder %s29, 1
          %s278 = scalar_select %p277, %s29, 1
          %s279 = scalar_lea.vmem %s3, %s278
        $region32: #{_linear_a8w8_quant_2d.1} parent=19 // pred_fallthru
          _
        // Predicated region
        $region33: #{_linear_a8w8_quant_2d.1} parent=19 // pred_check
          %p280 = pneg %p168
        $region34: #{_linear_a8w8_quant_2d.1} parent=19 // pred_check_branch
          %282 = sbr.rel (%p280) target = $region36
        $region35: #{_linear_a8w8_quant_2d.1} parent=19 // pred_region
          %s283 = sand.u32 %s158, 1
          %s284 = scalar_lea.sflag [#allocation10], %s283
          %s285 = sand.u32 %s158, 1
          %s286 = scalar_lea.vmem [#allocation9], %s285
          %288 = vsyncadd %s284, 0
          %s289 = scalar_lea.hbm %s4, %s29
          %s291 = sshll.u32 %s289, 4
          %s292 = int_to_ptr.hbm [resolvable:$true] %s291
          %s293 = sshll.u32 %s286, 4
          %s294 = int_to_ptr.vmem [resolvable:$true] %s293
          %296 = dma.hbm_to_vmem [thread:$0]  %s292, 16, %s294, %s284
        $region36: #{_linear_a8w8_quant_2d.1} parent=19 // pred_fallthru
          _
      $region20: #{_linear_a8w8_quant_2d.1} parent=5 // pred_fallthru
        _
      %p297 = scmp.le.s32.totalorder 1, %s21
      %p298 = scmp.lt.s32.totalorder %s21, 3
      %p299 = pnand %p297, %p298
      %p300 = pneg %p299
      // Predicated region
      $region37: #{_linear_a8w8_quant_2d.1} parent=5 // pred_check
        _
      $region38: #{_linear_a8w8_quant_2d.1} parent=5 // pred_check_branch
        %302 = sbr.rel (%p299) target = $region40
      $region39: #{_linear_a8w8_quant_2d.1} parent=5 // pred_region
        %s303 = ssub.s32 %s21, 1
        // Predicated region
        $region41: #{_linear_a8w8_quant_2d.1} parent=39 // pred_check
          %p304 = pneg %p68
        $region42: #{_linear_a8w8_quant_2d.1} parent=39 // pred_check_branch
          %306 = sbr.rel (%p304) target = $region44
        $region43: #{_linear_a8w8_quant_2d.1} parent=39 // pred_region
          %308 = dma.done [#allocation4], 128
        $region44: #{_linear_a8w8_quant_2d.1} parent=39 // pred_fallthru
          _
        %s309 = sand.u32 %s26, 1
        %s310 = scalar_lea.sflag [#allocation7], %s309
        %s311 = sand.u32 %s83, 1
        %s312 = smul.addr %s311, 8
        %s313 = scalar_lea.vmem [#allocation6], %s312
        // Predicated region
        $region45: #{_linear_a8w8_quant_2d.1} parent=39 // pred_check
          %p314 = pneg %p96
        $region46: #{_linear_a8w8_quant_2d.1} parent=39 // pred_check_branch
          %316 = sbr.rel (%p314) target = $region48
        $region47: #{_linear_a8w8_quant_2d.1} parent=39 // pred_region
          %318 = dma.done %s310, 128
        $region48: #{_linear_a8w8_quant_2d.1} parent=39 // pred_fallthru
          _
        %s319 = sand.u32 %s26, 1
        %s320 = scalar_lea.sflag [#allocation7], %s319
        %s321 = sand.u32 %s109, 1
        %s322 = scalar_lea.vmem [#allocation8], %s321
        // Predicated region
        $region49: #{_linear_a8w8_quant_2d.1} parent=39 // pred_check
          %p323 = pneg %p122
        $region50: #{_linear_a8w8_quant_2d.1} parent=39 // pred_check_branch
          %325 = sbr.rel (%p323) target = $region52
        $region51: #{_linear_a8w8_quant_2d.1} parent=39 // pred_region
          %327 = dma.done %s320, 16
        $region52: #{_linear_a8w8_quant_2d.1} parent=39 // pred_fallthru
          _
        %s328 = sand.u32 %s161, 1
        %s329 = scalar_lea.sflag [#allocation10], %s328
        %s330 = sand.u32 %s161, 1
        %s331 = scalar_lea.vmem [#allocation9], %s330
        // Predicated region
        $region53: #{_linear_a8w8_quant_2d.1} parent=39 // pred_check
          %p332 = pneg %p174
        $region54: #{_linear_a8w8_quant_2d.1} parent=39 // pred_check_branch
          %334 = sbr.rel (%p332) target = $region56
        $region55: #{_linear_a8w8_quant_2d.1} parent=39 // pred_region
          %336 = dma.done %s329, 16
        $region56: #{_linear_a8w8_quant_2d.1} parent=39 // pred_fallthru
          _
        %p337 = pneg %p68
        %p338 = pneg %p65
        %s339 = sand.u32 %s26, 1
        %s340 = scalar_lea.sflag [#allocation7], %s339
        %s341 = sand.u32 %s83, 1
        %s342 = smul.addr %s341, 8
        %s343 = scalar_lea.vmem [#allocation6], %s342
        %p344 = pneg %p96
        %p345 = pneg %p93
        %s346 = sand.u32 %s26, 1
        %s347 = scalar_lea.sflag [#allocation7], %s346
        %s348 = sand.u32 %s109, 1
        %s349 = scalar_lea.vmem [#allocation8], %s348
        %p350 = pneg %p122
        %p351 = pneg %p119
        %p352 = scmp.lt.s32.totalorder %s32, 1
        %s353 = scalar_select %p352, %s32, 1
        %s354 = scalar_lea.vmem %s3, %s353
        %p355 = pneg %p148
        %p356 = pneg %p145
        %s357 = sand.u32 %s161, 1
        %s358 = scalar_lea.sflag [#allocation10], %s357
        %s359 = sand.u32 %s161, 1
        %s360 = scalar_lea.vmem [#allocation9], %s359
        %p361 = pneg %p174
        %p362 = pneg %p171
        %p363 = pneg %p202
        %p364 = pneg %p199
        %s365 = sand.u32 %s189, 1
        %s366 = scalar_lea.sflag [#allocation5], %s365
        %s367 = sand.u32 %s189, 1
        %s368 = smul.addr %s367, 8
        %s369 = scalar_lea.vmem [#allocation11], %s368
        %p370 = scmp.lt.s32.totalorder %s32, 1
        %s371 = scalar_select %p370, %s32, 1
        %s372 = scalar_lea.vmem %s3, %s371
        %p374 = scmp.eq.s32.totalorder %s33, 0
        // Predicated region
        $region57: #{_linear_a8w8_quant_2d.1} parent=39 // pred_check
          %p375 = pneg %p374
        $region58: #{_linear_a8w8_quant_2d.1} parent=39 // pred_check_branch
          %377 = sbr.rel (%p375) target = $region60
        $region59: #{_linear_a8w8_quant_2d.1} parent=39 // pred_region
          %378 = vst [vmem:[#allocation2] sm:$0xff] 0
          %379 = vst [vmem:[#allocation2 + $0x8] sm:$0xff] 0
          %380 = vst [vmem:[#allocation2 + $0x10] sm:$0xff] 0
          %381 = vst [vmem:[#allocation2 + $0x18] sm:$0xff] 0
        $region60: #{_linear_a8w8_quant_2d.1} parent=39 // pred_fallthru
          _
        %v382 = vld [vmem:[#allocation3] sm:$0xff]
        %v383 = vunpack.c.0.s8 %v382
        %v384 = vunpack.c.1.s8 %v382
        %v385 = vunpack.c.2.s8 %v382
        %v386 = vunpack.c.3.s8 %v382
        %v387 = vcvt.s32.f32 %v383
        %v388 = vcvt.s32.f32 %v384
        %v389 = vcvt.s32.f32 %v385
        %v390 = vcvt.s32.f32 %v386
        %v391 = vpack.c.bf16 %v388, %v387
        %v392 = vpack.c.bf16 %v390, %v389
        %v393 = vld [vmem:[%s313] sm:$0xff]
        %v394 = vunpack.c.0.s8 %v393
        %v395 = vunpack.c.1.s8 %v393
        %v396 = vunpack.c.2.s8 %v393
        %v397 = vunpack.c.3.s8 %v393
        %v398 = vcvt.s32.f32 %v394
        %v399 = vcvt.s32.f32 %v395
        %v400 = vcvt.s32.f32 %v396
        %v401 = vcvt.s32.f32 %v397
        %v402 = vpack.c.bf16 %v399, %v398
        %v403 = vpack.c.bf16 %v401, %v400
        %vm404 = vcmask 261120
        %v406 = vsel %vm404, %v391, 0
        %v409 = vsel %vm404, %v392, 0
        %411 = vmatpush.bf16.msra.mxu0 0
        %412 = vmatpush.bf16.msra.mxu0 0
        %413 = vmatpush.bf16.msra.mxu0 0
        %414 = vmatpush.bf16.msra.mxu0 0
        %415 = vmatpush.bf16.msra.mxu0 0
        %416 = vmatpush.bf16.msra.mxu0 0
        %417 = vmatpush.bf16.msra.mxu0 %v403
        %418 = vmatpush.bf16.msra.mxu0 %v402
        %419 = vmatmul.bf16.gmra.mxu0 %v406
        %v420 = vpop.f32.mrf.mxu0
        %v421 = vadd.f32 0.0, %v420
        %v422 = vpop.f32.mrf.mxu0
        %v423 = vadd.f32 0.0, %v422
        %424 = vmatmul.bf16.gmra.mxu0 %v409
        %v425 = vpop.f32.mrf.mxu0
        %v426 = vadd.f32 0.0, %v425
        %v427 = vpop.f32.mrf.mxu0
        %v428 = vadd.f32 0.0, %v427
        %429 = vdwg.mxu0
        %v430 = vld [vmem:[#allocation2] sm:$0xff]
        %v431 = vld [vmem:[#allocation2 + $0x8] sm:$0xff]
        %v432 = vld [vmem:[#allocation2 + $0x10] sm:$0xff]
        %v433 = vld [vmem:[#allocation2 + $0x18] sm:$0xff]
        %v434 = vcvt.f32.s32.to.zero.pseudo %v421
        %v435 = vcvt.f32.s32.to.zero.pseudo %v423
        %v436 = vcvt.f32.s32.to.zero.pseudo %v426
        %v437 = vcvt.f32.s32.to.zero.pseudo %v428
        %v438 = vadd.s32 %v430, %v434
        %v439 = vadd.s32 %v431, %v435
        %v440 = vadd.s32 %v432, %v436
        %v441 = vadd.s32 %v433, %v437
        %442 = vst [vmem:[#allocation2] sm:$0xff] %v438
        %443 = vst [vmem:[#allocation2 + $0x8] sm:$0xff] %v439
        %444 = vst [vmem:[#allocation2 + $0x10] sm:$0xff] %v440
        %445 = vst [vmem:[#allocation2 + $0x18] sm:$0xff] %v441
        // Predicated region
        $region61: #{_linear_a8w8_quant_2d.1} parent=39 // pred_check
          %p446 = pneg %p374
        $region62: #{_linear_a8w8_quant_2d.1} parent=39 // pred_check_branch
          %448 = sbr.rel (%p446) target = $region64
        $region63: #{_linear_a8w8_quant_2d.1} parent=39 // pred_region
          %v449 = vld [vmem:[#allocation2] sm:$0xff]
          %v450 = vld [vmem:[#allocation2 + $0x8] sm:$0xff]
          %v451 = vld [vmem:[#allocation2 + $0x10] sm:$0xff]
          %v452 = vld [vmem:[#allocation2 + $0x18] sm:$0xff]
          %v453 = vld [vmem:[%s372] sm:$0x1]
          %v454 = vperm.slane %v453, 0
          %v455 = vadd.s32 %v449, %v454
          %v456 = vadd.s32 %v450, %v454
          %v457 = vadd.s32 %v451, %v454
          %v458 = vadd.s32 %v452, %v454
          %v459 = vcvt.s32.f32 %v455
          %v460 = vcvt.s32.f32 %v456
          %v461 = vcvt.s32.f32 %v457
          %v462 = vcvt.s32.f32 %v458
          %v463 = vld [vmem:[%s322] sm:$0x1]
          %v465 = vperm.slane %v463, 0
          %v467 = vmul.f32 %v459, %v465
          %v468 = vmul.f32 %v460, %v465
          %v469 = vmul.f32 %v461, %v465
          %v470 = vmul.f32 %v462, %v465
          %v471 = vld [vmem:[%s331] sm:$0x1]
          %v473 = vperm.slane %v471, 0
          %v475 = vadd.f32 %v467, %v473
          %v476 = vadd.f32 %v468, %v473
          %v477 = vadd.f32 %v469, %v473
          %v478 = vadd.f32 %v470, %v473
          %v479 = vround.ne.pseudo %v475
          %v480 = vround.ne.pseudo %v476
          %v481 = vround.ne.pseudo %v477
          %v482 = vround.ne.pseudo %v478
          %v483 = vmax.f32 %v479, -128.0
          %v484 = vmax.f32 %v480, -128.0
          %v485 = vmax.f32 %v481, -128.0
          %v486 = vmax.f32 %v482, -128.0
          %v487 = vmin.f32 %v483, 127.0
          %v488 = vmin.f32 %v484, 127.0
          %v489 = vmin.f32 %v485, 127.0
          %v490 = vmin.f32 %v486, 127.0
          %v491 = vmax.f32 %v487, -128.0
          %v492 = vmax.f32 %v488, -128.0
          %v493 = vmax.f32 %v489, -128.0
          %v494 = vmax.f32 %v490, -128.0
          %v495 = vmin.f32 %v491, 127.0
          %v496 = vmin.f32 %v492, 127.0
          %v497 = vmin.f32 %v493, 127.0
          %v498 = vmin.f32 %v494, 127.0
          %v499 = vcvt.f32.s32.to.zero.pseudo %v495
          %v500 = vcvt.f32.s32.to.zero.pseudo %v496
          %v501 = vcvt.f32.s32.to.zero.pseudo %v497
          %v502 = vcvt.f32.s32.to.zero.pseudo %v498
          %v503 = vpack.c.b16 %v500, %v499
          %v504 = vpack.c.b16 %v502, %v501
          %v505 = vpack.c.b8 %v504, %v503
          %506 = vst [vmem:[%s369] sm:$0xff] %v505
        $region64: #{_linear_a8w8_quant_2d.1} parent=39 // pred_fallthru
          _
        %s507 = sand.u32 %s189, 1
        %s508 = scalar_lea.sflag [#allocation5], %s507
        %s509 = sand.u32 %s189, 1
        %s510 = smul.addr %s509, 8
        %s511 = scalar_lea.vmem [#allocation11], %s510
        // Predicated region
        $region65: #{_linear_a8w8_quant_2d.1} parent=39 // pred_check
          %p512 = pneg %p199
        $region66: #{_linear_a8w8_quant_2d.1} parent=39 // pred_check_branch
          %514 = sbr.rel (%p512) target = $region68
        $region67: #{_linear_a8w8_quant_2d.1} parent=39 // pred_region
          %516 = vsyncadd %s508, 0
          %s517 = smul.addr %s31, 2
          %s518 = sadd.s32 %s32, %s517
          %s519 = smul.addr %s518, 8
          %s520 = scalar_lea.hbm %s5, %s519
          %s522 = sshll.u32 %s511, 4
          %s523 = int_to_ptr.vmem [resolvable:$true] %s522
          %s524 = sshll.u32 %s520, 4
          %s525 = int_to_ptr.hbm [resolvable:$true] %s524
          %527 = dma.vmem_to_hbm [thread:$0]  %s523, 128, %s525, %s508
        $region68: #{_linear_a8w8_quant_2d.1} parent=39 // pred_fallthru
          _
      $region40: #{_linear_a8w8_quant_2d.1} parent=5 // pred_fallthru
        _
      %p528 = scmp.le.s32.totalorder 2, %s21
      // Predicated region
      $region69: #{_linear_a8w8_quant_2d.1} parent=5 // pred_check
        %p529 = pneg %p528
      $region70: #{_linear_a8w8_quant_2d.1} parent=5 // pred_check_branch
        %531 = sbr.rel (%p529) target = $region72
      $region71: #{_linear_a8w8_quant_2d.1} parent=5 // pred_region
        %s532 = ssub.s32 %s21, 2
        // Predicated region
        $region73: #{_linear_a8w8_quant_2d.1} parent=71 // pred_check
          %p533 = pneg %p205
        $region74: #{_linear_a8w8_quant_2d.1} parent=71 // pred_check_branch
          %535 = sbr.rel (%p533) target = $region76
        $region75: #{_linear_a8w8_quant_2d.1} parent=71 // pred_region
          %s536 = sand.u32 %s190, 1
          %s537 = scalar_lea.sflag [#allocation5], %s536
          %s538 = sand.u32 %s190, 1
          %s539 = smul.addr %s538, 8
          %s540 = scalar_lea.vmem [#allocation11], %s539
          %542 = dma.done %s537, 128
        $region76: #{_linear_a8w8_quant_2d.1} parent=71 // pred_fallthru
          _
      $region72: #{_linear_a8w8_quant_2d.1} parent=5 // pred_fallthru
        _
    $region6: #{_linear_a8w8_quant_2d.1} parent=1 // loop_footer
      %s25 = sadd.s32 1, %s21
    $region7: #{_linear_a8w8_quant_2d.1} parent=1 // loop_footer_branch
      %20 = sbr.rel target = $region3
    $region8: #{_linear_a8w8_quant_2d.1} parent=1 // loop_exit
      _
    %543 = vsyncpa [#allocation4], 1
    %s544 = scalar_lea.sflag [#allocation4], 1
    %545 = vsyncpa %s544, 1
    %546 = vsyncpa [#allocation7], 1
    %s547 = scalar_lea.sflag [#allocation7], 1
    %548 = vsyncpa %s547, 1
    %549 = vsyncpa [#allocation10], 1
    %s550 = scalar_lea.sflag [#allocation10], 1
    %551 = vsyncpa %s550, 1
    %552 = vsyncpa [#allocation5], 1
    %s553 = scalar_lea.sflag [#allocation5], 1
    %554 = vsyncpa %s553, 1

</llo_original>
